<compile_context>
chip_gen: v6e
topology: v6e:2x2x1
jax: 0.10.0
libtpu: 0.0.40
codegen_flags: <defaults>
</compile_context>

<pallas_src>
import functools

import jax
import jax.numpy as jnp
from jax import lax
from jax.experimental import pallas as pl
from jax.experimental.pallas import tpu as pltpu

KSIZE = 3  # 3x3 conv, padding 1


def _rdb_kernel(x_ref, w_ref, out_ref, xpad_ref, lhs_ref, *, H, W):
    """One batch element per grid step (all arrays are channels x pixels).

    x_ref    : (C, H*W)            input image (pixels on lanes)
    w_ref    : (G, 9*C)            conv weights, column index = (kh*3+kw)*C + c
    out_ref  : (C+G, H*W)          concat([x, relu(conv(x))]) along channels
    xpad_ref : (C, H*W + 2*(W+1))  VMEM: image with a flat 1-row+1-px zero halo
    lhs_ref  : (9*C, H*W)          VMEM: im2col matrix (shifted input windows)
    """
    C = x_ref.shape[0]
    HW = x_ref.shape[1]
    halo = W + 1

    x = x_ref[...]                                   # (C, HW)

    # Zero only the halo lanes; the interior is fully overwritten below.
    zeros_halo = jnp.zeros((C, halo), x.dtype)
    xpad_ref[:, :halo] = zeros_halo
    xpad_ref[:, halo + HW:] = zeros_halo
    xpad_ref[:, halo:halo + HW] = x

    # Column-boundary masks (row boundaries are handled by the flat halo:
    # any vertical out-of-image access lands in the zeroed halo lanes).
    w_idx = lax.broadcasted_iota(jnp.int32, (C, HW), dimension=1) % W
    zero = jnp.zeros((C, HW), x.dtype)
    left_ok = w_idx >= 1           # source pixel (w-1) is inside the image
    right_ok = w_idx <= W - 2      # source pixel (w+1) is inside the image

    # Build the im2col matrix: 9 shifted copies of the image, tap-major rows.
    for kh in range(KSIZE):
        for kw in range(KSIZE):
            dy, dx = kh - 1, kw - 1
            off = halo + dy * W + dx                 # static lane offset
            val = xpad_ref[:, off:off + HW]
            if dx == -1:
                val = jnp.where(left_ok, val, zero)
            elif dx == 1:
                val = jnp.where(right_ok, val, zero)
            t = kh * KSIZE + kw
            lhs_ref[t * C:(t + 1) * C, :] = val

    # Single MXU matmul over all 9 taps at once: (G, 9C) @ (9C, HW) -> (G, HW).
    y = jnp.dot(w_ref[...], lhs_ref[...], preferred_element_type=jnp.float32)
    y = jnp.maximum(y, 0.0).astype(out_ref.dtype)

    # Channel concat; both stores span the full lane width (HW lanes).
    out_ref[:C, :] = x
    out_ref[C:, :] = y


def rdb_forward(x_nchw, weight_oihw):
    """x_nchw: (B, C, H, W), weight_oihw: (G, C, 3, 3) -> (B, C+G, H, W)."""
    B, C, H, W = x_nchw.shape
    G = weight_oihw.shape[0]
    HW = H * W

    # Free reshape (no data movement): spatial dims flattened onto lanes.
    x_flat = x_nchw.reshape(B, C, HW)
    # OIHW -> (G, kh, kw, C) -> (G, 9*C); column index = (kh*3 + kw)*C + c.
    # (Tiny weight tensor; this transpose is negligible.)
    w_flat = jnp.transpose(weight_oihw, (0, 2, 3, 1)).reshape(
        G, KSIZE * KSIZE * C).astype(x_nchw.dtype)

    out_flat = pl.pallas_call(
        functools.partial(_rdb_kernel, H=H, W=W),
        out_shape=jax.ShapeDtypeStruct((B, C + G, HW), x_nchw.dtype),
        grid_spec=pltpu.PrefetchScalarGridSpec(
            num_scalar_prefetch=0,
            grid=(B,),
            in_specs=[
                pl.BlockSpec((None, C, HW), lambda b: (b, 0, 0)),
                pl.BlockSpec((G, KSIZE * KSIZE * C), lambda b: (0, 0)),
            ],
            out_specs=pl.BlockSpec((None, C + G, HW), lambda b: (b, 0, 0)),
            scratch_shapes=[
                pltpu.VMEM((C, HW + 2 * (W + 1)), x_nchw.dtype),
                pltpu.VMEM((KSIZE * KSIZE * C, HW), x_nchw.dtype),
            ],
        ),
        compiler_params=pltpu.CompilerParams(
            dimension_semantics=("parallel",)),
    )(x_flat, w_flat)

    # Free reshape back to NCHW.
    return out_flat.reshape(B, C + G, H, W)


def rdb_reference(x_nchw, weight_oihw):
    """Pure-JAX reference (lax conv) for correctness checking."""
    conv = lax.conv_general_dilated(
        x_nchw.astype(jnp.float32),
        weight_oihw.astype(jnp.float32),
        window_strides=(1, 1),
        padding=((1, 1), (1, 1)),
        dimension_numbers=("NCHW", "OIHW", "NCHW"),
    )
    return jnp.concatenate(
        [x_nchw, jnp.maximum(conv, 0.0).astype(x_nchw.dtype)], axis=1)


if __name__ == "__main__":
    # Module config: RDB(nChannels=4, nDenselayer=?, growthRate=8)
    # (nDenselayer is unused by the PyTorch module: it builds one make_dense.)
    B, C, H, W = 2, 4, 16, 16
    G = 8

    key = jax.random.PRNGKey(0)
    kx, kw = jax.random.split(key)

    x = jax.random.normal(kx, (B, C, H, W), dtype=jnp.float32)

    # Deterministic init matching nn.Conv2d default (kaiming uniform, a=sqrt(5))
    # => U(-1/sqrt(fan_in), 1/sqrt(fan_in)), fan_in = C * 3 * 3.
    fan_in = C * KSIZE * KSIZE
    bound = 1.0 / (fan_in ** 0.5)
    weight = jax.random.uniform(
        kw, (G, C, KSIZE, KSIZE), minval=-bound, maxval=bound,
        dtype=jnp.float32)

    out = jax.block_until_ready(rdb_forward(x, weight))

    ref = rdb_reference(x, weight)
    assert out.shape == (B, C + G, H, W), out.shape
    assert jnp.allclose(out, ref, atol=1e-5, rtol=1e-5), "mismatch vs reference"

    print("KERNEL_OK")
</pallas_src>

<mosaic_0001>
module attributes {stable_mosaic.version = 11 : i64} {
  func.func @_rdb_kernel(%arg0: i32, %arg1: memref<1x4x256xf32, #tpu.memory_space<vmem>>, %arg2: memref<8x36xf32, #tpu.memory_space<vmem>>, %arg3: memref<1x12x256xf32, #tpu.memory_space<vmem>>, %arg4: memref<4x290xf32, #tpu.memory_space<vmem>>, %arg5: memref<36x256xf32, #tpu.memory_space<vmem>>) attributes {dimension_semantics = [#tpu.dimension_semantics<parallel>], iteration_bounds = array<i64: 2>, scalar_prefetch = 0 : i64, scratch_operands = 2 : i64, tpu.core_type = #tpu.core_type<tc>, window_params = [{transform_indices = @transform_0, window_bounds = array<i64: 1, 4, 256>}, {pipeline_mode = #tpu.pipeline_mode<synchronous>, transform_indices = @transform_1, window_bounds = array<i64: 8, 36>}, {transform_indices = @transform_2, window_bounds = array<i64: 1, 12, 256>}]} {
    %c0 = arith.constant 0 : index
    %c0_0 = arith.constant 0 : index
    %c0_1 = arith.constant 0 : index
    %0 = vector.load %arg1[%c0, %c0_0, %c0_1] : memref<1x4x256xf32, #tpu.memory_space<vmem>>, vector<1x4x256xf32>
    %1 = vector.shape_cast %0 : vector<1x4x256xf32> to vector<4x256xf32>
    %cst = arith.constant 0.000000e+00 : f32
    %2 = vector.broadcast %cst : f32 to vector<4x17xf32>
    %c0_2 = arith.constant 0 : index
    %c0_3 = arith.constant 0 : index
    %3 = vector.load %arg4[%c0_2, %c0_3] : memref<4x290xf32, #tpu.memory_space<vmem>>, vector<4x17xf32>
    tpu.vector_store %arg4[%c0_2, %c0_3], %2 {strides = array<i32>} : memref<4x290xf32, #tpu.memory_space<vmem>>, vector<4x17xf32>,
    %c0_4 = arith.constant 0 : index
    %c273 = arith.constant 273 : index
    %4 = vector.load %arg4[%c0_4, %c273] : memref<4x290xf32, #tpu.memory_space<vmem>>, vector<4x17xf32>
    tpu.vector_store %arg4[%c0_4, %c273], %2 {strides = array<i32>} : memref<4x290xf32, #tpu.memory_space<vmem>>, vector<4x17xf32>,
    %c0_5 = arith.constant 0 : index
    %c17 = arith.constant 17 : index
    %5 = vector.load %arg4[%c0_5, %c17] : memref<4x290xf32, #tpu.memory_space<vmem>>, vector<4x256xf32>
    tpu.vector_store %arg4[%c0_5, %c17], %1 {strides = array<i32>} : memref<4x290xf32, #tpu.memory_space<vmem>>, vector<4x256xf32>,
    %6 = tpu.iota {dimensions = array<i32: 1>} : vector<4x256xi32>
    %c16_i32 = arith.constant 16 : i32
    %c0_i32 = arith.constant 0 : i32
    %7 = arith.cmpi eq, %c16_i32, %c0_i32 : i32
    %c1_i32 = arith.constant 1 : i32
    %8 = arith.select %7, %c1_i32, %c16_i32 : i32
    %9 = vector.broadcast %8 : i32 to vector<4x256xi32>
    %10 = arith.remsi %6, %9 : vector<4x256xi32>
    %c0_i32_6 = arith.constant 0 : i32
    %11 = vector.broadcast %c0_i32_6 : i32 to vector<4x256xi32>
    %12 = arith.cmpi ne, %10, %11 : vector<4x256xi32>
    %c0_i32_7 = arith.constant 0 : i32
    %13 = vector.broadcast %c0_i32_7 : i32 to vector<4x256xi32>
    %14 = arith.cmpi slt, %10, %13 : vector<4x256xi32>
    %c0_i32_8 = arith.constant 0 : i32
    %15 = arith.cmpi slt, %8, %c0_i32_8 : i32
    %16 = vector.broadcast %15 : i1 to vector<4x256xi1>
    %17 = vector.broadcast %16 : vector<4x256xi1> to vector<4x256xi1>
    %18 = arith.xori %14, %17 : vector<4x256xi1>
    %19 = arith.andi %18, %12 : vector<4x256xi1>
    %20 = vector.broadcast %8 : i32 to vector<4x256xi32>
    %21 = arith.addi %10, %20 : vector<4x256xi32>
    %22 = arith.select %19, %21, %10 : vector<4x256xi1>, vector<4x256xi32>
    %cst_9 = arith.constant 0.000000e+00 : f32
    %23 = vector.broadcast %cst_9 : f32 to vector<4x256xf32>
    %c1_i32_10 = arith.constant 1 : i32
    %24 = vector.broadcast %c1_i32_10 : i32 to vector<4x256xi32>
    %25 = arith.cmpi sge, %22, %24 : vector<4x256xi32>
    %c14_i32 = arith.constant 14 : i32
    %26 = vector.broadcast %c14_i32 : i32 to vector<4x256xi32>
    %27 = arith.cmpi sle, %22, %26 : vector<4x256xi32>
    %c0_11 = arith.constant 0 : index
    %c0_12 = arith.constant 0 : index
    %28 = vector.load %arg4[%c0_11, %c0_12] : memref<4x290xf32, #tpu.memory_space<vmem>>, vector<4x256xf32>
    %29 = arith.select %25, %28, %23 : vector<4x256xi1>, vector<4x256xf32>
    %c0_13 = arith.constant 0 : index
    %c0_14 = arith.constant 0 : index
    %30 = vector.load %arg5[%c0_13, %c0_14] : memref<36x256xf32, #tpu.memory_space<vmem>>, vector<4x256xf32>
    tpu.vector_store %arg5[%c0_13, %c0_14], %29 {strides = array<i32>} : memref<36x256xf32, #tpu.memory_space<vmem>>, vector<4x256xf32>,
    %c0_15 = arith.constant 0 : index
    %c1 = arith.constant 1 : index
    %31 = vector.load %arg4[%c0_15, %c1] : memref<4x290xf32, #tpu.memory_space<vmem>>, vector<4x256xf32>
    %c4 = arith.constant 4 : index
    %c0_16 = arith.constant 0 : index
    %32 = vector.load %arg5[%c4, %c0_16] : memref<36x256xf32, #tpu.memory_space<vmem>>, vector<4x256xf32>
    tpu.vector_store %arg5[%c4, %c0_16], %31 {strides = array<i32>} : memref<36x256xf32, #tpu.memory_space<vmem>>, vector<4x256xf32>,
    %c0_17 = arith.constant 0 : index
    %c2 = arith.constant 2 : index
    %33 = vector.load %arg4[%c0_17, %c2] : memref<4x290xf32, #tpu.memory_space<vmem>>, vector<4x256xf32>
    %34 = arith.select %27, %33, %23 : vector<4x256xi1>, vector<4x256xf32>
    %c8 = arith.constant 8 : index
    %c0_18 = arith.constant 0 : index
    %35 = vector.load %arg5[%c8, %c0_18] : memref<36x256xf32, #tpu.memory_space<vmem>>, vector<4x256xf32>
    tpu.vector_store %arg5[%c8, %c0_18], %34 {strides = array<i32>} : memref<36x256xf32, #tpu.memory_space<vmem>>, vector<4x256xf32>,
    %c0_19 = arith.constant 0 : index
    %c16 = arith.constant 16 : index
    %36 = vector.load %arg4[%c0_19, %c16] : memref<4x290xf32, #tpu.memory_space<vmem>>, vector<4x256xf32>
    %37 = arith.select %25, %36, %23 : vector<4x256xi1>, vector<4x256xf32>
    %c12 = arith.constant 12 : index
    %c0_20 = arith.constant 0 : index
    %38 = vector.load %arg5[%c12, %c0_20] : memref<36x256xf32, #tpu.memory_space<vmem>>, vector<4x256xf32>
    tpu.vector_store %arg5[%c12, %c0_20], %37 {strides = array<i32>} : memref<36x256xf32, #tpu.memory_space<vmem>>, vector<4x256xf32>,
    %c0_21 = arith.constant 0 : index
    %c17_22 = arith.constant 17 : index
    %39 = vector.load %arg4[%c0_21, %c17_22] : memref<4x290xf32, #tpu.memory_space<vmem>>, vector<4x256xf32>
    %c16_23 = arith.constant 16 : index
    %c0_24 = arith.constant 0 : index
    %40 = vector.load %arg5[%c16_23, %c0_24] : memref<36x256xf32, #tpu.memory_space<vmem>>, vector<4x256xf32>
    tpu.vector_store %arg5[%c16_23, %c0_24], %39 {strides = array<i32>} : memref<36x256xf32, #tpu.memory_space<vmem>>, vector<4x256xf32>,
    %c0_25 = arith.constant 0 : index
    %c18 = arith.constant 18 : index
    %41 = vector.load %arg4[%c0_25, %c18] : memref<4x290xf32, #tpu.memory_space<vmem>>, vector<4x256xf32>
    %42 = arith.select %27, %41, %23 : vector<4x256xi1>, vector<4x256xf32>
    %c20 = arith.constant 20 : index
    %c0_26 = arith.constant 0 : index
    %43 = vector.load %arg5[%c20, %c0_26] : memref<36x256xf32, #tpu.memory_space<vmem>>, vector<4x256xf32>
    tpu.vector_store %arg5[%c20, %c0_26], %42 {strides = array<i32>} : memref<36x256xf32, #tpu.memory_space<vmem>>, vector<4x256xf32>,
    %c0_27 = arith.constant 0 : index
    %c32 = arith.constant 32 : index
    %44 = vector.load %arg4[%c0_27, %c32] : memref<4x290xf32, #tpu.memory_space<vmem>>, vector<4x256xf32>
    %45 = arith.select %25, %44, %23 : vector<4x256xi1>, vector<4x256xf32>
    %c24 = arith.constant 24 : index
    %c0_28 = arith.constant 0 : index
    %46 = vector.load %arg5[%c24, %c0_28] : memref<36x256xf32, #tpu.memory_space<vmem>>, vector<4x256xf32>
    tpu.vector_store %arg5[%c24, %c0_28], %45 {strides = array<i32>} : memref<36x256xf32, #tpu.memory_space<vmem>>, vector<4x256xf32>,
    %c0_29 = arith.constant 0 : index
    %c33 = arith.constant 33 : index
    %47 = vector.load %arg4[%c0_29, %c33] : memref<4x290xf32, #tpu.memory_space<vmem>>, vector<4x256xf32>
    %c28 = arith.constant 28 : index
    %c0_30 = arith.constant 0 : index
    %48 = vector.load %arg5[%c28, %c0_30] : memref<36x256xf32, #tpu.memory_space<vmem>>, vector<4x256xf32>
    tpu.vector_store %arg5[%c28, %c0_30], %47 {strides = array<i32>} : memref<36x256xf32, #tpu.memory_space<vmem>>, vector<4x256xf32>,
    %c0_31 = arith.constant 0 : index
    %c34 = arith.constant 34 : index
    %49 = vector.load %arg4[%c0_31, %c34] : memref<4x290xf32, #tpu.memory_space<vmem>>, vector<4x256xf32>
    %50 = arith.select %27, %49, %23 : vector<4x256xi1>, vector<4x256xf32>
    %c32_32 = arith.constant 32 : index
    %c0_33 = arith.constant 0 : index
    %51 = vector.load %arg5[%c32_32, %c0_33] : memref<36x256xf32, #tpu.memory_space<vmem>>, vector<4x256xf32>
    tpu.vector_store %arg5[%c32_32, %c0_33], %50 {strides = array<i32>} : memref<36x256xf32, #tpu.memory_space<vmem>>, vector<4x256xf32>,
    %c0_34 = arith.constant 0 : index
    %c0_35 = arith.constant 0 : index
    %52 = vector.load %arg2[%c0_34, %c0_35] : memref<8x36xf32, #tpu.memory_space<vmem>>, vector<8x36xf32>
    %c0_36 = arith.constant 0 : index
    %c0_37 = arith.constant 0 : index
    %53 = vector.load %arg5[%c0_36, %c0_37] : memref<36x256xf32, #tpu.memory_space<vmem>>, vector<36x256xf32>
    %cst_38 = arith.constant dense<0.000000e+00> : vector<8x256xf32>
    %54 = tpu.matmul %52, %53, %cst_38 {dimension_numbers = #tpu.dot_dimension_numbers<[1], [0], [0], [1], [0, 0, 1, 1], [], []>} : vector<8x36xf32>, vector<36x256xf32>, vector<8x256xf32> -> vector<8x256xf32>
    %cst_39 = arith.constant 0.000000e+00 : f32
    %55 = vector.broadcast %cst_39 : f32 to vector<8x256xf32>
    %56 = arith.maximumf %54, %55 : vector<8x256xf32>
    %c0_40 = arith.constant 0 : index
    %c0_41 = arith.constant 0 : index
    %c0_42 = arith.constant 0 : index
    %57 = vector.load %arg3[%c0_40, %c0_41, %c0_42] : memref<1x12x256xf32, #tpu.memory_space<vmem>>, vector<1x4x256xf32>
    %58 = vector.shape_cast %57 : vector<1x4x256xf32> to vector<4x256xf32>
    %59 = vector.shape_cast %1 : vector<4x256xf32> to vector<1x4x256xf32>
    tpu.vector_store %arg3[%c0_40, %c0_41, %c0_42], %59 {strides = array<i32>} : memref<1x12x256xf32, #tpu.memory_space<vmem>>, vector<1x4x256xf32>,
    %c0_43 = arith.constant 0 : index
    %c4_44 = arith.constant 4 : index
    %c0_45 = arith.constant 0 : index
    %60 = vector.load %arg3[%c0_43, %c4_44, %c0_45] : memref<1x12x256xf32, #tpu.memory_space<vmem>>, vector<1x8x256xf32>
    %61 = vector.shape_cast %60 : vector<1x8x256xf32> to vector<8x256xf32>
    %62 = vector.shape_cast %56 : vector<8x256xf32> to vector<1x8x256xf32>
    tpu.vector_store %arg3[%c0_43, %c4_44, %c0_45], %62 {strides = array<i32>} : memref<1x12x256xf32, #tpu.memory_space<vmem>>, vector<1x8x256xf32>,
    return
  }
  func.func @transform_0(%arg0: i32) -> (i32, i32, i32) {
    %c0_i32 = arith.constant 0 : i32
    %c0_i32_0 = arith.constant 0 : i32
    %c0_i32_1 = arith.constant 0 : i32
    return %arg0, %c0_i32, %c0_i32_0 : i32, i32, i32
  }
  func.func @transform_1(%arg0: i32) -> (i32, i32) {
    %c0_i32 = arith.constant 0 : i32
    %c0_i32_0 = arith.constant 0 : i32
    %c0_i32_1 = arith.constant 0 : i32
    return %c0_i32, %c0_i32_0 : i32, i32
  }
  func.func @transform_2(%arg0: i32) -> (i32, i32, i32) {
    %c0_i32 = arith.constant 0 : i32
    %c0_i32_0 = arith.constant 0 : i32
    %c0_i32_1 = arith.constant 0 : i32
    return %arg0, %c0_i32, %c0_i32_0 : i32, i32, i32
  }
}

</mosaic_0001>

<llo_original>
// kernel: tpu_custom_call.1
$region0: #{tpu_custom_call.1}
  #allocation0 [shape = 'u32[]', space=smem, size = 0x4, offset = 0x4, fixed_abs, tag = 'smem constant byte address 0x4 - core index']
  #allocation1 [shape = 'u32[144,128]{1,0:T(1,128)}', space=vmem, size = 0x12000, scoped, tag = 'internal scratch']
  #allocation2 [shape = 'f32[4,290]{1,0:T(4,128)}', space=vmem, size = 0x1800, scoped, tag = 'scratch operand']
  #allocation3 [shape = 'f32[36,256]{1,0:T(8,128)}', space=vmem, size = 0xa000, scoped, tag = 'scratch operand']
  %s0 = inlined_call_operand.hbm [shape: f32[2,4,256], index: 0, kind: input, shape index: {}]
  %s1 = inlined_call_operand.hbm [shape: f32[8,36], index: 1, kind: input, shape index: {}]
  %s2 = inlined_call_operand.vmem [shape: f32[2,12,256], index: 2, kind: output, shape index: {}]
  %s3 = sld [smem:[#allocation0]]
  $region49: #{tpu_custom_call.1} parent=0
    _
  %s5 = ssub.s32 1, %s3
  %s6 = scalar_select 0, %s5, %s3
  $region1: #{tpu_custom_call.1} parent=0
    #allocation4 [shape = 'u8[8192]{0}', space=vmem, size = 0x2000, scoped, tag = 'input window, operand 0']
    #allocation5 [shape = 's32[2]{0}', space=sflag, size = 0x8, scoped, tag = 'scoped memory for tpu_custom_call.1']
    #allocation6 [shape = 'u8[4096]{0}', space=vmem, size = 0x1000, scoped, tag = 'input window, operand 1, single buffered']
    #allocation7 [shape = 's32[1]{0}', space=sflag, size = 0x4, scoped, tag = 'scoped memory for tpu_custom_call.1']
    %7 = vsyncpa [#allocation5], 0
    %s8 = scalar_lea.sflag [#allocation5], 1
    %9 = vsyncpa %s8, 0
    %10 = vsyncpa [#allocation7], 0
    loop: start=0, step=1, limit=4
    $region2: #{tpu_custom_call.1} parent=1 // loop_pre_header
      _
    $region3: #{tpu_custom_call.1} parent=1 // loop_header
      %s12 = sphi 0, %s16
      %p13 = scmp.ge.s32.totalorder %s12, 4
      %s22 = sphi 0, %s24
      %s25 = sphi 0, %s22
      %s26 = sphi 0, %s25
      %s42 = sphi 0, %s26
      %s46 = sphi 0, %s46
      %s48 = sphi 0, %s46
      %s49 = sphi 0, %s48
      %s63 = sphi 0, %s49
      %s69 = sphi 0, %s71
      %s72 = sphi 0, %s69
      %s73 = sphi 0, %s72
      %s89 = sphi 0, %s73
    $region4: #{tpu_custom_call.1} parent=1 // loop_header_branch
      %15 = sbr.rel (%p13) target = $region8
    $region5: #{tpu_custom_call.1} parent=1 // loop_body
      %s17 = ssub.s32 %s12, 1
      %s18 = ssub.s32 %s12, 2
      %s19 = sadd.s32 %s12, 1
      %s20 = ssub.s32 %s12, %s19
      %p21 = scmp.eq.s32.totalorder %s20, 0
      %s23 = sadd.s32 %s22, 1
      %s24 = scalar_select %p21, %s22, %s23
      %p27 = pneg %p21
      %p28 = scmp.eq.s32.totalorder %s12, 1
      %p29 = por %p27, %p28
      %p30 = scmp.ne.s32.totalorder %s22, %s25
      %p31 = scmp.eq.s32.totalorder %s12, 0
      %p32 = por %p30, %p31
      %p33 = scmp.ne.s32.totalorder %s22, %s25
      %p34 = scmp.eq.s32.totalorder %s17, 1
      %p35 = por %p33, %p34
      %p36 = scmp.ne.s32.totalorder %s25, %s26
      %p37 = scmp.eq.s32.totalorder %s17, 0
      %p38 = por %p36, %p37
      %p39 = scmp.ne.s32.totalorder %s25, %s26
      %p40 = scmp.eq.s32.totalorder %s18, 1
      %p41 = por %p39, %p40
      %p43 = scmp.ne.s32.totalorder %s26, %s42
      %p44 = scmp.eq.s32.totalorder %s18, 0
      %p45 = por %p43, %p44
      %s47 = sadd.s32 %s46, 1
      %p50 = scmp.eq.s32.totalorder %s12, 1
      %p51 = scmp.ne.s32.totalorder %s46, %s48
      %p52 = scmp.eq.s32.totalorder %s12, 0
      %p53 = por %p51, %p52
      %p54 = scmp.ne.s32.totalorder %s46, %s48
      %p55 = scmp.eq.s32.totalorder %s17, 1
      %p56 = por %p54, %p55
      %p57 = scmp.ne.s32.totalorder %s48, %s49
      %p58 = scmp.eq.s32.totalorder %s17, 0
      %p59 = por %p57, %p58
      %p60 = scmp.ne.s32.totalorder %s48, %s49
      %p61 = scmp.eq.s32.totalorder %s18, 1
      %p62 = por %p60, %p61
      %p64 = scmp.ne.s32.totalorder %s49, %s63
      %p65 = scmp.eq.s32.totalorder %s18, 0
      %p66 = por %p64, %p65
      %s67 = ssub.s32 %s12, %s19
      %p68 = scmp.eq.s32.totalorder %s67, 0
      %s70 = sadd.s32 %s69, 1
      %s71 = scalar_select %p68, %s69, %s70
      %p74 = pneg %p68
      %p75 = scmp.eq.s32.totalorder %s12, 1
      %p76 = por %p74, %p75
      %p77 = scmp.ne.s32.totalorder %s69, %s72
      %p78 = scmp.eq.s32.totalorder %s12, 0
      %p79 = por %p77, %p78
      %p80 = scmp.ne.s32.totalorder %s69, %s72
      %p81 = scmp.eq.s32.totalorder %s17, 1
      %p82 = por %p80, %p81
      %p83 = scmp.ne.s32.totalorder %s72, %s73
      %p84 = scmp.eq.s32.totalorder %s17, 0
      %p85 = por %p83, %p84
      %p86 = scmp.ne.s32.totalorder %s72, %s73
      %p87 = scmp.eq.s32.totalorder %s18, 1
      %p88 = por %p86, %p87
      %p90 = scmp.ne.s32.totalorder %s73, %s89
      %p91 = scmp.eq.s32.totalorder %s18, 0
      %p92 = por %p90, %p91
      %p93 = scmp.le.s32.totalorder 1, %s12
      %p94 = scmp.lt.s32.totalorder %s12, 3
      %p95 = pnand %p93, %p94
      %p96 = pneg %p95
      // Predicated region
      $region9: #{tpu_custom_call.1} parent=5 // pred_check
        _
      $region10: #{tpu_custom_call.1} parent=5 // pred_check_branch
        %98 = sbr.rel (%p95) target = $region12
      $region11: #{tpu_custom_call.1} parent=5 // pred_region
        %s99 = ssub.s32 %s12, 1
        // Predicated region
        $region13: #{tpu_custom_call.1} parent=11 // pred_check
          %p100 = pneg %p59
        $region14: #{tpu_custom_call.1} parent=11 // pred_check_branch
          %102 = sbr.rel (%p100) target = $region16
        $region15: #{tpu_custom_call.1} parent=11 // pred_region
          %s104 = ssub.s32 128, 128
          %105 = vsyncadd [#allocation7], %s104
          %s107 = sshll.u32 [#allocation6], 4
          %s108 = int_to_ptr.vmem [resolvable:$true] %s107
          %110 = dma.hbm_to_vmem [thread:$0]  %s1, 128, %s108, [#allocation7]
        $region16: #{tpu_custom_call.1} parent=11 // pred_fallthru
          _
      $region12: #{tpu_custom_call.1} parent=5 // pred_fallthru
        _
      %p111 = scmp.lt.s32.totalorder %s12, 2
      // Predicated region
      $region17: #{tpu_custom_call.1} parent=5 // pred_check
        %p112 = pneg %p111
      $region18: #{tpu_custom_call.1} parent=5 // pred_check_branch
        %114 = sbr.rel (%p112) target = $region20
      $region19: #{tpu_custom_call.1} parent=5 // pred_region
        // Predicated region
        $region21: #{tpu_custom_call.1} parent=19 // pred_check
          %p115 = pneg %p32
        $region22: #{tpu_custom_call.1} parent=19 // pred_check_branch
          %117 = sbr.rel (%p115) target = $region24
        $region23: #{tpu_custom_call.1} parent=19 // pred_region
          %s118 = sand.u32 %s22, 1
          %s119 = scalar_lea.sflag [#allocation5], %s118
          %s120 = sand.u32 %s22, 1
          %s121 = smul.addr %s120, 8
          %s122 = scalar_lea.vmem [#allocation4], %s121
          %s124 = ssub.s32 128, 128
          %125 = vsyncadd %s119, %s124
          %s126 = smul.addr %s12, 2
          %s127 = smul.addr %s126, 64
          %s128 = scalar_lea.hbm %s0, %s127
          %s130 = sshll.u32 %s122, 4
          %s131 = int_to_ptr.vmem [resolvable:$true] %s130
          %133 = dma.hbm_to_vmem [thread:$0]  %s128, 128, %s131, %s119
        $region24: #{tpu_custom_call.1} parent=19 // pred_fallthru
          _
      $region20: #{tpu_custom_call.1} parent=5 // pred_fallthru
        _
      %p134 = scmp.le.s32.totalorder 1, %s12
      %p135 = scmp.lt.s32.totalorder %s12, 3
      %p136 = pnand %p134, %p135
      %p137 = pneg %p136
      // Predicated region
      $region25: #{tpu_custom_call.1} parent=5 // pred_check
        _
      $region26: #{tpu_custom_call.1} parent=5 // pred_check_branch
        %139 = sbr.rel (%p136) target = $region28
      $region27: #{tpu_custom_call.1} parent=5 // pred_region
        %s140 = ssub.s32 %s12, 1
        %s141 = sand.u32 %s25, 1
        %s142 = scalar_lea.sflag [#allocation5], %s141
        %s143 = sand.u32 %s25, 1
        %s144 = smul.addr %s143, 8
        %s145 = scalar_lea.vmem [#allocation4], %s144
        // Predicated region
        $region29: #{tpu_custom_call.1} parent=27 // pred_check
          %p146 = pneg %p38
        $region30: #{tpu_custom_call.1} parent=27 // pred_check_branch
          %148 = sbr.rel (%p146) target = $region32
        $region31: #{tpu_custom_call.1} parent=27 // pred_region
          %149 = dma.done %s142, 128
        $region32: #{tpu_custom_call.1} parent=27 // pred_fallthru
          _
        // Predicated region
        $region33: #{tpu_custom_call.1} parent=27 // pred_check
          %p150 = pneg %p59
        $region34: #{tpu_custom_call.1} parent=27 // pred_check_branch
          %152 = sbr.rel (%p150) target = $region36
        $region35: #{tpu_custom_call.1} parent=27 // pred_region
          %153 = dma.done [#allocation7], 128
        $region36: #{tpu_custom_call.1} parent=27 // pred_fallthru
          _
        %s154 = sand.u32 %s25, 1
        %s155 = scalar_lea.sflag [#allocation5], %s154
        %s156 = sand.u32 %s25, 1
        %s157 = smul.addr %s156, 8
        %s158 = scalar_lea.vmem [#allocation4], %s157
        %p159 = pneg %p38
        %p160 = pneg %p35
        %p161 = pneg %p59
        %p162 = pneg %p56
        %p163 = pneg %p85
        %p164 = pneg %p82
        %p165 = scmp.lt.s32.totalorder %s17, 1
        %s166 = scalar_select %p165, %s17, 1
        %s167 = smul.addr %s166, 4
        %s168 = smul.addr %s167, 8
        %s169 = scalar_lea.vmem %s2, %s168
        %p170 = scmp.lt.s32.totalorder %s17, 1
        %s171 = scalar_select %p170, %s17, 1
        %s172 = smul.addr %s171, 4
        %s173 = smul.addr %s172, 8
        %s174 = scalar_lea.vmem %s2, %s173
        %v175 = vld [vmem:[%s145] sm:$0xff]
        %vm176 = vcmask 134144
        %177 = vst.msk [vmem:[#allocation2] sm:$0xf] %vm176, 0.0
        %vm178 = vcmask 273544
        %179 = vst.msk [vmem:[#allocation2 + $0x8] sm:$0xf] %vm178, 0.0
        %181 = vrot.lane.b32.xlu0 %v175, 17
        %v182 = vpop.permute.xlu0 %181
        %v183 = vrot.slane %v182, 4
        %vm184 = vcmask 138240
        %v185 = vsel %vm184, %v183, %v182
        %vm188 = vcmask 1043592
        %vm189 = vcmask 1047556
        %vm190 = vmor %vm189, %vm188
        %191 = vst.msk [vmem:[#allocation2] sm:$0xff] %vm190, %v185
        %192 = vst.msk [vmem:[#allocation2 + $0x8] sm:$0xf] %vm176, %v183
        %v193 = vlaneseq
        %v194 = vand.u32 %v193, 127
        %v195 = vadd.s32 %v194, 128
        %vm196 = vcmp.lt.s32.totalorder %v194, 0
        %v197 = vsub.s32 0, %v194
        %v198 = vsel %vm196, %v197, %v194
        %v199 = vshrl.u32 %v198, 4
        %v200 = vand.u32 %v198, 15
        %v201 = vsub.s32 0, %v200
        %v202 = vsel %vm196, %v201, %v200
        %vm203 = vcmp.lt.s32.totalorder %v195, 0
        %v204 = vsub.s32 0, %v195
        %v205 = vsel %vm203, %v204, %v195
        %v206 = vshrl.u32 %v205, 4
        %v207 = vand.u32 %v205, 15
        %v208 = vsub.s32 0, %v207
        %v209 = vsel %vm203, %v208, %v207
        %vm210 = vcmp.ne.s32.totalorder %v202, 0
        %vm211 = vcmp.ne.s32.totalorder %v209, 0
        %vm212 = vcmp.lt.s32.totalorder %v202, 0
        %vm213 = vcmp.lt.s32.totalorder %v209, 0
        %vm214 = vmand %vm212, %vm210
        %vm215 = vmand %vm213, %vm211
        %v216 = vadd.s32 %v202, 16
        %v217 = vadd.s32 %v209, 16
        %v218 = vsel %vm214, %v216, %v202
        %v219 = vsel %vm215, %v217, %v209
        %vm220 = vcmp.ge.s32.totalorder %v218, 1
        %vm221 = vcmp.ge.s32.totalorder %v219, 1
        %vm222 = vcmp.le.s32.totalorder %v218, 14
        %vm223 = vcmp.le.s32.totalorder %v219, 14
        %v224 = vld [vmem:[#allocation2] sm:$0xff]
        %v226 = vcombine.high %v224, %v224
        %v228 = vsel %vm220, %v224, 0.0
        %v229 = vsel %vm221, %v226, 0.0
        %230 = vst [vmem:[#allocation3] sm:$0xf] %v228
        %231 = vst [vmem:[#allocation3 + $0x8] sm:$0xf] %v229
        %v232 = vld [vmem:[#allocation2] sm:$0xff]
        %v233 = vld [vmem:[#allocation2 + $0x8] sm:$0xf]
        %v236 = vcombine.low %v232, %v232
        %v237 = vcombine.low %v233, %v233
        %238 = vrot.lane.b32.xlu0 %v236, 127
        %v239 = vpop.permute.xlu0 %238
        %240 = vrot.lane.b32.xlu0 %v232, 127
        %v241 = vpop.permute.xlu0 %240
        %242 = vrot.lane.b32.xlu0 %v237, 127
        %v243 = vpop.permute.xlu0 %242
        %vm244 = vcmask 1039360
        %v245 = vsel %vm244, %v239, %v241
        %v246 = vsel %vm244, %v241, %v243
        %249 = vst [vmem:[#allocation3] sm:$0xf0] %v245
        %250 = vst [vmem:[#allocation3 + $0x8] sm:$0xf0] %v246
        %v251 = vld [vmem:[#allocation2] sm:$0xff]
        %v252 = vld [vmem:[#allocation2 + $0x8] sm:$0xf]
        %v255 = vcombine.high %v251, %v251
        %256 = vrot.lane.b32.xlu0 %v251, 126
        %v257 = vpop.permute.xlu0 %256
        %258 = vrot.lane.b32.xlu0 %v255, 126
        %v259 = vpop.permute.xlu0 %258
        %260 = vrot.lane.b32.xlu0 %v252, 126
        %v261 = vpop.permute.xlu0 %260
        %vm262 = vcmask 1031168
        %v263 = vsel %vm262, %v257, %v259
        %v264 = vsel %vm262, %v259, %v261
        %v267 = vsel %vm222, %v263, 0.0
        %v268 = vsel %vm223, %v264, 0.0
        %269 = vst [vmem:[#allocation3 + $0x10] sm:$0xf] %v267
        %270 = vst [vmem:[#allocation3 + $0x18] sm:$0xf] %v268
        %v271 = vld [vmem:[#allocation2] sm:$0xff]
        %v272 = vld [vmem:[#allocation2 + $0x8] sm:$0xf]
        %v275 = vcombine.high %v271, %v271
        %276 = vrot.lane.b32.xlu0 %v271, 112
        %v277 = vpop.permute.xlu0 %276
        %278 = vrot.lane.b32.xlu0 %v275, 112
        %v279 = vpop.permute.xlu0 %278
        %280 = vrot.lane.b32.xlu0 %v272, 112
        %v281 = vpop.permute.xlu0 %280
        %vm282 = vcmask 916480
        %v283 = vsel %vm282, %v277, %v279
        %v284 = vsel %vm282, %v279, %v281
        %v287 = vsel %vm220, %v283, 0.0
        %v288 = vsel %vm221, %v284, 0.0
        %v291 = vrot.slane %v287, 4
        %v292 = vrot.slane %v288, 4
        %295 = vst [vmem:[#allocation3 + $0x10] sm:$0xf0] %v291
        %296 = vst [vmem:[#allocation3 + $0x18] sm:$0xf0] %v292
        %v297 = vld [vmem:[#allocation2] sm:$0xff]
        %v298 = vld [vmem:[#allocation2 + $0x8] sm:$0xf]
        %v301 = vcombine.high %v297, %v297
        %302 = vrot.lane.b32.xlu0 %v297, 111
        %v303 = vpop.permute.xlu0 %302
        %304 = vrot.lane.b32.xlu0 %v301, 111
        %v305 = vpop.permute.xlu0 %304
        %306 = vrot.lane.b32.xlu0 %v298, 111
        %v307 = vpop.permute.xlu0 %306
        %vm308 = vcmask 908288
        %v309 = vsel %vm308, %v303, %v305
        %v310 = vsel %vm308, %v305, %v307
        %313 = vst [vmem:[#allocation3 + $0x20] sm:$0xf] %v309
        %314 = vst [vmem:[#allocation3 + $0x28] sm:$0xf] %v310
        %v315 = vld [vmem:[#allocation2] sm:$0xff]
        %v316 = vld [vmem:[#allocation2 + $0x8] sm:$0xf]
        %v319 = vcombine.high %v315, %v315
        %320 = vrot.lane.b32.xlu0 %v315, 110
        %v321 = vpop.permute.xlu0 %320
        %322 = vrot.lane.b32.xlu0 %v319, 110
        %v323 = vpop.permute.xlu0 %322
        %324 = vrot.lane.b32.xlu0 %v316, 110
        %v325 = vpop.permute.xlu0 %324
        %vm326 = vcmask 900096
        %v327 = vsel %vm326, %v321, %v323
        %v328 = vsel %vm326, %v323, %v325
        %v331 = vsel %vm222, %v327, 0.0
        %v332 = vsel %vm223, %v328, 0.0
        %v335 = vrot.slane %v331, 4
        %v336 = vrot.slane %v332, 4
        %339 = vst [vmem:[#allocation3 + $0x20] sm:$0xf0] %v335
        %340 = vst [vmem:[#allocation3 + $0x28] sm:$0xf0] %v336
        %v341 = vld [vmem:[#allocation2] sm:$0xff]
        %v342 = vld [vmem:[#allocation2 + $0x8] sm:$0xf]
        %v345 = vcombine.high %v341, %v341
        %346 = vrot.lane.b32.xlu0 %v341, 96
        %v347 = vpop.permute.xlu0 %346
        %348 = vrot.lane.b32.xlu0 %v345, 96
        %v349 = vpop.permute.xlu0 %348
        %350 = vrot.lane.b32.xlu0 %v342, 96
        %v351 = vpop.permute.xlu0 %350
        %vm352 = vcmask 785408
        %v353 = vsel %vm352, %v347, %v349
        %v354 = vsel %vm352, %v349, %v351
        %v357 = vsel %vm220, %v353, 0.0
        %v358 = vsel %vm221, %v354, 0.0
        %359 = vst [vmem:[#allocation3 + $0x30] sm:$0xf] %v357
        %360 = vst [vmem:[#allocation3 + $0x38] sm:$0xf] %v358
        %v361 = vld [vmem:[#allocation2] sm:$0xff]
        %v362 = vld [vmem:[#allocation2 + $0x8] sm:$0xf]
        %v365 = vcombine.low %v361, %v361
        %v366 = vcombine.low %v362, %v362
        %367 = vrot.lane.b32.xlu0 %v365, 95
        %v368 = vpop.permute.xlu0 %367
        %369 = vrot.lane.b32.xlu0 %v361, 95
        %v370 = vpop.permute.xlu0 %369
        %371 = vrot.lane.b32.xlu0 %v366, 95
        %v372 = vpop.permute.xlu0 %371
        %vm373 = vcmask 777216
        %v374 = vsel %vm373, %v368, %v370
        %v375 = vsel %vm373, %v370, %v372
        %378 = vst [vmem:[#allocation3 + $0x30] sm:$0xf0] %v374
        %379 = vst [vmem:[#allocation3 + $0x38] sm:$0xf0] %v375
        %v380 = vld [vmem:[#allocation2] sm:$0xff]
        %v381 = vld [vmem:[#allocation2 + $0x8] sm:$0xf]
        %v384 = vcombine.high %v380, %v380
        %385 = vrot.lane.b32.xlu0 %v380, 94
        %v386 = vpop.permute.xlu0 %385
        %387 = vrot.lane.b32.xlu0 %v384, 94
        %v388 = vpop.permute.xlu0 %387
        %389 = vrot.lane.b32.xlu0 %v381, 94
        %v390 = vpop.permute.xlu0 %389
        %vm391 = vcmask 769024
        %v392 = vsel %vm391, %v386, %v388
        %v393 = vsel %vm391, %v388, %v390
        %v396 = vsel %vm222, %v392, 0.0
        %v397 = vsel %vm223, %v393, 0.0
        %398 = vst [vmem:[#allocation3 + $0x40] sm:$0xf] %v396
        %399 = vst [vmem:[#allocation3 + $0x48] sm:$0xf] %v397
        %v400 = vld [vmem:[#allocation6] sm:$0xff]
        %v401 = vld [vmem:[#allocation3] sm:$0xff]
        %v402 = vld [vmem:[#allocation3 + $0x8] sm:$0xff]
        %v403 = vld [vmem:[#allocation3 + $0x10] sm:$0xff]
        %v404 = vld [vmem:[#allocation3 + $0x18] sm:$0xff]
        %v405 = vld [vmem:[#allocation3 + $0x20] sm:$0xff]
        %v406 = vld [vmem:[#allocation3 + $0x28] sm:$0xff]
        %v407 = vld [vmem:[#allocation3 + $0x30] sm:$0xff]
        %v408 = vld [vmem:[#allocation3 + $0x38] sm:$0xff]
        %v409 = vld [vmem:[#allocation3 + $0x40] sm:$0xf]
        %v410 = vld [vmem:[#allocation3 + $0x48] sm:$0xf]
        %vm411 = vcmask 293888
        %v413 = vsel %vm411, %v400, 0
        %vm415 = vcmask 1043456
        %v417 = vsel %vm415, %v409, 0
        %v420 = vsel %vm415, %v410, 0
        %422 = vmatprep.subr.mxu0 0.0
        %423 = vmatpush1.msra.mxu0 0.0
        %424 = vmatprep.subr.mxu0 0.0
        %425 = vmatpush1.msra.mxu0 0.0
        %426 = vmatprep.subr.mxu0 0.0
        %427 = vmatpush1.msra.mxu0 0.0
        %428 = vmatprep.subr.mxu0 0.0
        %429 = vmatpush1.msra.mxu0 0.0
        %430 = vmatprep.subr.mxu0 0.0
        %431 = vmatpush1.msra.mxu0 0.0
        %432 = vmatprep.subr.mxu0 0.0
        %433 = vmatpush1.msra.mxu0 0.0
        %434 = vmatprep.subr.mxu0 0.0
        %435 = vmatpush1.msra.mxu0 0.0
        %436 = vmatprep.subr.mxu0 0.0
        %437 = vmatpush1.msra.mxu0 0.0
        %438 = vmatprep.subr.mxu0 0.0
        %439 = vmatpush1.msra.mxu0 0.0
        %440 = vmatprep.subr.mxu0 0.0
        %441 = vmatpush1.msra.mxu0 0.0
        %442 = vmatprep.subr.mxu0 0.0
        %443 = vmatpush1.msra.mxu0 0.0
        %444 = vmatprep.subr.mxu0 %v420
        %445 = vmatpush1.msra.mxu0 %v417
        %446 = vmatprep.subr.mxu0 %v408
        %447 = vmatpush1.msra.mxu0 %v407
        %448 = vmatprep.subr.mxu0 %v406
        %449 = vmatpush1.msra.mxu0 %v405
        %450 = vmatprep.subr.mxu0 %v404
        %451 = vmatpush1.msra.mxu0 %v403
        %452 = vmatprep.subr.mxu0 %v402
        %453 = vmatpush1.msra.mxu0 %v401
        %454 = vmatprep.subr.mxu0 0.0
        %455 = vmatpush2.msra.mxu0 0.0
        %456 = vmatprep.subr.mxu0 0.0
        %457 = vmatpush2.msra.mxu0 0.0
        %458 = vmatprep.subr.mxu0 0.0
        %459 = vmatpush2.msra.mxu0 0.0
        %460 = vmatprep.subr.mxu0 0.0
        %461 = vmatpush2.msra.mxu0 0.0
        %462 = vmatprep.subr.mxu0 0.0
        %463 = vmatpush2.msra.mxu0 0.0
        %464 = vmatprep.subr.mxu0 0.0
        %465 = vmatpush2.msra.mxu0 0.0
        %466 = vmatprep.subr.mxu0 0.0
        %467 = vmatpush2.msra.mxu0 0.0
        %468 = vmatprep.subr.mxu0 0.0
        %469 = vmatpush2.msra.mxu0 0.0
        %470 = vmatprep.subr.mxu0 0.0
        %471 = vmatpush2.msra.mxu0 0.0
        %472 = vmatprep.subr.mxu0 0.0
        %473 = vmatpush2.msra.mxu0 0.0
        %474 = vmatprep.subr.mxu0 0.0
        %475 = vmatpush2.msra.mxu0 0.0
        %476 = vmatprep.subr.mxu0 0.0
        %477 = vmatpush2.msra.mxu0 0.0
        %478 = vmatprep.subr.mxu0 0.0
        %479 = vmatpush2.msra.mxu0 0.0
        %480 = vmatprep.subr.mxu0 0.0
        %481 = vmatpush2.msra.mxu0 0.0
        %482 = vmatprep.subr.mxu0 0.0
        %483 = vmatpush2.msra.mxu0 0.0
        %484 = vmatprep.subr.mxu0 0.0
        %485 = vmatpush2.msra.mxu0 0.0
        %486 = vmatprep.mubr.f32.mxu0 0.0
        %487 = vmatmul.mubr.f32.gmra.mxu0 %v413
        %v488 = vpop.f32.mrf.mxu0
        %v489 = vadd.f32 0.0, %v488
        %v490 = vpop.f32.mrf.mxu0
        %v491 = vadd.f32 0.0, %v490
        %492 = vdwg.mxu0
        %v493 = vmax.f32 %v489, 0.0
        %v494 = vmax.f32 %v491, 0.0
        %v495 = vcombine.high %v175, %v175
        %497 = vst [vmem:[%s174] sm:$0xf] %v175
        %498 = vst [vmem:[%s174 + $0x8] sm:$0xf] %v495
        %v501 = vrot.slane %v493, 4
        %v502 = vrot.slane %v494, 4
        %505 = vst [vmem:[%s174] sm:$0xf0] %v501
        %506 = vst [vmem:[%s174 + $0x8] sm:$0xf0] %v502
        %507 = vst [vmem:[%s174 + $0x10] sm:$0xf] %v501
        %508 = vst [vmem:[%s174 + $0x18] sm:$0xf] %v502
        %p509 = scmp.lt.s32.totalorder %s17, 1
        %s510 = scalar_select %p509, %s17, 1
        %s511 = smul.addr %s510, 4
        %s512 = smul.addr %s511, 8
        %s513 = scalar_lea.vmem %s2, %s512
        // Predicated region
        $region37: #{tpu_custom_call.1} parent=27 // pred_check
          %p514 = pneg %p82
        $region38: #{tpu_custom_call.1} parent=27 // pred_check_branch
          %516 = sbr.rel (%p514) target = $region40
        $region39: #{tpu_custom_call.1} parent=27 // pred_region
          _
        $region40: #{tpu_custom_call.1} parent=27 // pred_fallthru
          _
      $region28: #{tpu_custom_call.1} parent=5 // pred_fallthru
        _
      %p517 = scmp.le.s32.totalorder 2, %s12
      // Predicated region
      $region41: #{tpu_custom_call.1} parent=5 // pred_check
        %p518 = pneg %p517
      $region42: #{tpu_custom_call.1} parent=5 // pred_check_branch
        %520 = sbr.rel (%p518) target = $region44
      $region43: #{tpu_custom_call.1} parent=5 // pred_region
        %s521 = ssub.s32 %s12, 2
        // Predicated region
        $region45: #{tpu_custom_call.1} parent=43 // pred_check
          %p522 = pneg %p88
        $region46: #{tpu_custom_call.1} parent=43 // pred_check_branch
          %524 = sbr.rel (%p522) target = $region48
        $region47: #{tpu_custom_call.1} parent=43 // pred_region
          %p525 = scmp.lt.s32.totalorder %s18, 1
          %s526 = scalar_select %p525, %s18, 1
          %s527 = smul.addr %s526, 4
          %s528 = smul.addr %s527, 8
          %s529 = scalar_lea.vmem %s2, %s528
        $region48: #{tpu_custom_call.1} parent=43 // pred_fallthru
          _
      $region44: #{tpu_custom_call.1} parent=5 // pred_fallthru
        _
    $region6: #{tpu_custom_call.1} parent=1 // loop_footer
      %s16 = sadd.s32 1, %s12
    $region7: #{tpu_custom_call.1} parent=1 // loop_footer_branch
      %11 = sbr.rel target = $region3
    $region8: #{tpu_custom_call.1} parent=1 // loop_exit
      _
    %530 = vsyncpa [#allocation5], 1
    %s531 = scalar_lea.sflag [#allocation5], 1
    %532 = vsyncpa %s531, 1
    %533 = vsyncpa [#allocation7], 1

</llo_original>
